<compile_context>
chip_gen: v5e
topology: v5e:2x2
jax: 0.10.0
libtpu: 0.0.40
codegen_flags: <defaults>
</compile_context>

<pallas_src>
import jax
import jax.numpy as jnp
from jax.experimental import pallas as pl
from jax.experimental.pallas import tpu as pltpu


def _encoder_kernel(x_ref, w1_ref, b1_ref, w2_ref, b2_ref, w3_ref, b3_ref, out_ref):
    x = x_ref[...]                                                       # (TB, D)

    z1 = jnp.dot(x, w1_ref[...], preferred_element_type=jnp.float32)    # MXU
    z1 = jnp.maximum(z1 + b1_ref[...], 0.0)                              # (TB, H)

    z2 = jnp.dot(z1, w2_ref[...], preferred_element_type=jnp.float32)   # MXU (BN1 folded in)
    z2 = jnp.maximum(z2 + b2_ref[...], 0.0)                              # (TB, H2)

    # Final H/2 -> 1 projection (BN2 folded in): VPU multiply + lane reduce
    # instead of an N=1 matmul; result lands with batch on lanes.
    y = jnp.sum(z2 * w3_ref[...], axis=-1)                               # (TB,)
    out_ref[...] = y[None, :] + b3_ref[...]                              # (1, TB) lane-dense


def fold_inference_params(params, eps=1e-5):
    """Fold eval-mode BatchNorm scale/shift into the downstream Linear weights."""
    s1 = params["bn1_gamma"] / jnp.sqrt(params["bn1_var"] + eps)
    t1 = params["bn1_beta"] - params["bn1_mean"] * s1
    s2 = params["bn2_gamma"] / jnp.sqrt(params["bn2_var"] + eps)
    t2 = params["bn2_beta"] - params["bn2_mean"] * s2

    w2f = s1[:, None] * params["w2"]                 # (H, H2)
    b2f = params["b2"] + t1 @ params["w2"]           # (H2,)
    w3f = s2 * params["w3"][:, 0]                    # (H2,)  column -> row vector
    b3f = params["b3"] + t2 @ params["w3"]           # (1,)
    return dict(w1=params["w1"], b1=params["b1"], w2=w2f, b2=b2f, w3=w3f, b3=b3f)


def _pick_batch_tile(B, D):
    """Largest 128-aligned batch tile within a ~8 MiB (double-buffered) x budget."""
    if B <= 1024:
        return B                                     # full-extent block, always legal
    budget_rows = (8 * 1024 * 1024) // (2 * D * 4)   # double-buffered f32 x tile
    tb = min(1024, budget_rows)
    return max(128, (tb // 128) * 128)


def position_aware_attention_forward(x, pos_idx, folded):
    """x: (B, D) f32, pos_idx: (B,) int32 (provably unused, see header).

    Returns (B,) f32 — matches torch's out.squeeze() for B > 1.
    """
    del pos_idx  # softmax over the size-1 attention dim is identically 1.0
    B, D = x.shape
    H = folded["w1"].shape[1]
    H2 = folded["w2"].shape[1]

    TB = _pick_batch_tile(B, D)
    grid = (pl.cdiv(B, TB),)

    operands = (
        x.astype(jnp.float32),
        folded["w1"], folded["b1"][None, :],
        folded["w2"], folded["b2"][None, :],
        folded["w3"][None, :],
        folded["b3"][None, :],
    )

    flops = 2 * B * (D * H + H * H2 + H2)
    bytes_accessed = 4 * (B * D + D * H + H + H * H2 + 2 * H2 + 1 + B)

    out = pl.pallas_call(
        _encoder_kernel,
        out_shape=jax.ShapeDtypeStruct((1, B), jnp.float32),
        grid=grid,
        in_specs=[
            pl.BlockSpec((TB, D), lambda i: (i, 0)),    # x tiled over batch
            pl.BlockSpec((D, H), lambda i: (0, 0)),     # weights stay resident
            pl.BlockSpec((1, H), lambda i: (0, 0)),
            pl.BlockSpec((H, H2), lambda i: (0, 0)),
            pl.BlockSpec((1, H2), lambda i: (0, 0)),
            pl.BlockSpec((1, H2), lambda i: (0, 0)),
            pl.BlockSpec((1, 1), lambda i: (0, 0)),
        ],
        out_specs=pl.BlockSpec((1, TB), lambda i: (0, i)),   # lane-dense output
        compiler_params=pltpu.CompilerParams(
            dimension_semantics=("parallel",)),
        cost_estimate=pl.CostEstimate(
            flops=flops, transcendentals=0, bytes_accessed=bytes_accessed),
    )(*operands)
    return out[0]


def init_params(key, input_size, num_positions, hidden_size):
    D, H = input_size, hidden_size
    ks = jax.random.split(key, 10)

    def lin(k, fan_in, fan_out):
        bound = 1.0 / jnp.sqrt(fan_in)
        kw, kb = jax.random.split(k)
        w = jax.random.uniform(kw, (fan_in, fan_out), jnp.float32, -bound, bound)
        b = jax.random.uniform(kb, (fan_out,), jnp.float32, -bound, bound)
        return w, b

    wa1, ba1 = lin(ks[0], 2 * D, D)
    wa2, ba2 = lin(ks[1], D, 1)
    w1, b1 = lin(ks[2], D, H)
    w2, b2 = lin(ks[3], H, H // 2)
    w3, b3 = lin(ks[4], H // 2, 1)
    emb = jax.random.normal(ks[5], (num_positions, D), jnp.float32)

    return dict(
        emb=emb,
        wa1=wa1, ba1=ba1, wa2=wa2, ba2=ba2,
        w1=w1, b1=b1, w2=w2, b2=b2, w3=w3, b3=b3,
        bn1_gamma=jnp.ones((H,), jnp.float32), bn1_beta=jnp.zeros((H,), jnp.float32),
        bn1_mean=jnp.zeros((H,), jnp.float32), bn1_var=jnp.ones((H,), jnp.float32),
        bn2_gamma=jnp.ones((H // 2,), jnp.float32), bn2_beta=jnp.zeros((H // 2,), jnp.float32),
        bn2_mean=jnp.zeros((H // 2,), jnp.float32), bn2_var=jnp.ones((H // 2,), jnp.float32),
    )


def _reference_forward(x, pos_idx, params, eps=1e-5):
    """Pure-JAX reference with the *full* module (attention path included)."""
    pe = params["emb"][pos_idx]
    h = jnp.tanh(jnp.concatenate([x, pe], axis=1) @ params["wa1"] + params["ba1"])
    score = h @ params["wa2"] + params["ba2"]                 # (B, 1)
    attn = jax.nn.softmax(score, axis=1)                      # == 1.0 (size-1 axis)
    wx = x * attn
    z1 = jnp.maximum(wx @ params["w1"] + params["b1"], 0.0)
    z1 = (z1 - params["bn1_mean"]) / jnp.sqrt(params["bn1_var"] + eps) \
        * params["bn1_gamma"] + params["bn1_beta"]
    z2 = jnp.maximum(z1 @ params["w2"] + params["b2"], 0.0)
    z2 = (z2 - params["bn2_mean"]) / jnp.sqrt(params["bn2_var"] + eps) \
        * params["bn2_gamma"] + params["bn2_beta"]
    z3 = z2 @ params["w3"] + params["b3"]
    return jnp.squeeze(z3, axis=-1)


if __name__ == "__main__":
    B, D, NUM_POS, H = 8, 16, 10, 32

    key = jax.random.PRNGKey(0)
    k_x, k_idx, k_p = jax.random.split(key, 3)
    x = jax.random.normal(k_x, (B, D), jnp.float32)
    pos_idx = jax.random.randint(k_idx, (B,), 0, NUM_POS, dtype=jnp.int32)
    params = init_params(k_p, D, NUM_POS, H)
    folded = fold_inference_params(params)

    # Small-shape check (single tile).
    out = position_aware_attention_forward(x, pos_idx, folded)
    jax.block_until_ready(out)
    assert out.shape == (B,)
    ref = _reference_forward(x, pos_idx, params)
    assert jnp.allclose(out, ref, rtol=1e-5, atol=1e-5), (out, ref)

    # Multi-tile check (exercises the batch-tiled grid path).
    B2 = 2048
    x2 = jax.random.normal(jax.random.PRNGKey(1), (B2, D), jnp.float32)
    idx2 = jax.random.randint(jax.random.PRNGKey(2), (B2,), 0, NUM_POS, dtype=jnp.int32)
    out2 = position_aware_attention_forward(x2, idx2, folded)
    jax.block_until_ready(out2)
    assert out2.shape == (B2,)
    ref2 = _reference_forward(x2, idx2, params)
    assert jnp.allclose(out2, ref2, rtol=1e-5, atol=1e-5)

    print("KERNEL_OK")
</pallas_src>

<mosaic_0001>
module attributes {stable_mosaic.version = 11 : i64} {
  func.func @_encoder_kernel(%arg0: i32, %arg1: memref<8x16xf32, #tpu.memory_space<vmem>>, %arg2: memref<16x32xf32, #tpu.memory_space<vmem>>, %arg3: memref<1x32xf32, #tpu.memory_space<vmem>>, %arg4: memref<32x16xf32, #tpu.memory_space<vmem>>, %arg5: memref<1x16xf32, #tpu.memory_space<vmem>>, %arg6: memref<1x16xf32, #tpu.memory_space<vmem>>, %arg7: memref<1x1xf32, #tpu.memory_space<vmem>>, %arg8: memref<1x8xf32, #tpu.memory_space<vmem>>) attributes {dimension_semantics = [#tpu.dimension_semantics<parallel>], iteration_bounds = array<i64: 1>, scalar_prefetch = 0 : i64, scratch_operands = 0 : i64, tpu.core_type = #tpu.core_type<tc>, window_params = [{transform_indices = @transform_0, window_bounds = array<i64: 8, 16>}, {pipeline_mode = #tpu.pipeline_mode<synchronous>, transform_indices = @transform_1, window_bounds = array<i64: 16, 32>}, {pipeline_mode = #tpu.pipeline_mode<synchronous>, transform_indices = @transform_2, window_bounds = array<i64: 1, 32>}, {pipeline_mode = #tpu.pipeline_mode<synchronous>, transform_indices = @transform_3, window_bounds = array<i64: 32, 16>}, {pipeline_mode = #tpu.pipeline_mode<synchronous>, transform_indices = @transform_4, window_bounds = array<i64: 1, 16>}, {pipeline_mode = #tpu.pipeline_mode<synchronous>, transform_indices = @transform_5, window_bounds = array<i64: 1, 16>}, {pipeline_mode = #tpu.pipeline_mode<synchronous>, transform_indices = @transform_6, window_bounds = array<i64: 1, 1>}, {transform_indices = @transform_7, window_bounds = array<i64: 1, 8>}]} {
    %c0 = arith.constant 0 : index
    %c0_0 = arith.constant 0 : index
    %0 = vector.load %arg1[%c0, %c0_0] : memref<8x16xf32, #tpu.memory_space<vmem>>, vector<8x16xf32>
    %c0_1 = arith.constant 0 : index
    %c0_2 = arith.constant 0 : index
    %1 = vector.load %arg2[%c0_1, %c0_2] : memref<16x32xf32, #tpu.memory_space<vmem>>, vector<16x32xf32>
    %cst = arith.constant dense<0.000000e+00> : vector<8x32xf32>
    %2 = tpu.matmul %0, %1, %cst {dimension_numbers = #tpu.dot_dimension_numbers<[1], [0], [0], [1], [0, 0, 1, 1], [], []>} : vector<8x16xf32>, vector<16x32xf32>, vector<8x32xf32> -> vector<8x32xf32>
    %c0_3 = arith.constant 0 : index
    %c0_4 = arith.constant 0 : index
    %3 = vector.load %arg3[%c0_3, %c0_4] : memref<1x32xf32, #tpu.memory_space<vmem>>, vector<1x32xf32>
    %4 = vector.broadcast %3 : vector<1x32xf32> to vector<8x32xf32>
    %5 = arith.addf %2, %4 : vector<8x32xf32>
    %cst_5 = arith.constant 0.000000e+00 : f32
    %6 = vector.broadcast %cst_5 : f32 to vector<8x32xf32>
    %7 = arith.maximumf %5, %6 : vector<8x32xf32>
    %c0_6 = arith.constant 0 : index
    %c0_7 = arith.constant 0 : index
    %8 = vector.load %arg4[%c0_6, %c0_7] : memref<32x16xf32, #tpu.memory_space<vmem>>, vector<32x16xf32>
    %cst_8 = arith.constant dense<0.000000e+00> : vector<8x16xf32>
    %9 = tpu.matmul %7, %8, %cst_8 {dimension_numbers = #tpu.dot_dimension_numbers<[1], [0], [0], [1], [0, 0, 1, 1], [], []>} : vector<8x32xf32>, vector<32x16xf32>, vector<8x16xf32> -> vector<8x16xf32>
    %c0_9 = arith.constant 0 : index
    %c0_10 = arith.constant 0 : index
    %10 = vector.load %arg5[%c0_9, %c0_10] : memref<1x16xf32, #tpu.memory_space<vmem>>, vector<1x16xf32>
    %11 = vector.broadcast %10 : vector<1x16xf32> to vector<8x16xf32>
    %12 = arith.addf %9, %11 : vector<8x16xf32>
    %cst_11 = arith.constant 0.000000e+00 : f32
    %13 = vector.broadcast %cst_11 : f32 to vector<8x16xf32>
    %14 = arith.maximumf %12, %13 : vector<8x16xf32>
    %c0_12 = arith.constant 0 : index
    %c0_13 = arith.constant 0 : index
    %15 = vector.load %arg6[%c0_12, %c0_13] : memref<1x16xf32, #tpu.memory_space<vmem>>, vector<1x16xf32>
    %16 = vector.broadcast %15 : vector<1x16xf32> to vector<8x16xf32>
    %17 = arith.mulf %14, %16 : vector<8x16xf32>
    %cst_14 = arith.constant dense<0.000000e+00> : vector<8xf32>
    %18 = vector.multi_reduction <add>, %17, %cst_14 [1] : vector<8x16xf32> to vector<8xf32>
    %19 = vector.shape_cast %18 : vector<8xf32> to vector<1x8xf32>
    %c0_15 = arith.constant 0 : index
    %c0_16 = arith.constant 0 : index
    %20 = vector.load %arg7[%c0_15, %c0_16] : memref<1x1xf32, #tpu.memory_space<vmem>>, vector<1x1xf32>
    %21 = vector.broadcast %20 : vector<1x1xf32> to vector<1x8xf32>
    %22 = arith.addf %19, %21 : vector<1x8xf32>
    %c0_17 = arith.constant 0 : index
    %c0_18 = arith.constant 0 : index
    %23 = vector.load %arg8[%c0_17, %c0_18] : memref<1x8xf32, #tpu.memory_space<vmem>>, vector<1x8xf32>
    tpu.vector_store %arg8[%c0_17, %c0_18], %22 {strides = array<i32>} : memref<1x8xf32, #tpu.memory_space<vmem>>, vector<1x8xf32>,
    return
  }
  func.func @transform_0(%arg0: i32) -> (i32, i32) {
    %c0_i32 = arith.constant 0 : i32
    %c0_i32_0 = arith.constant 0 : i32
    return %arg0, %c0_i32 : i32, i32
  }
  func.func @transform_1(%arg0: i32) -> (i32, i32) {
    %c0_i32 = arith.constant 0 : i32
    %c0_i32_0 = arith.constant 0 : i32
    %c0_i32_1 = arith.constant 0 : i32
    return %c0_i32, %c0_i32_0 : i32, i32
  }
  func.func @transform_2(%arg0: i32) -> (i32, i32) {
    %c0_i32 = arith.constant 0 : i32
    %c0_i32_0 = arith.constant 0 : i32
    %c0_i32_1 = arith.constant 0 : i32
    return %c0_i32, %c0_i32_0 : i32, i32
  }
  func.func @transform_3(%arg0: i32) -> (i32, i32) {
    %c0_i32 = arith.constant 0 : i32
    %c0_i32_0 = arith.constant 0 : i32
    %c0_i32_1 = arith.constant 0 : i32
    return %c0_i32, %c0_i32_0 : i32, i32
  }
  func.func @transform_4(%arg0: i32) -> (i32, i32) {
    %c0_i32 = arith.constant 0 : i32
    %c0_i32_0 = arith.constant 0 : i32
    %c0_i32_1 = arith.constant 0 : i32
    return %c0_i32, %c0_i32_0 : i32, i32
  }
  func.func @transform_5(%arg0: i32) -> (i32, i32) {
    %c0_i32 = arith.constant 0 : i32
    %c0_i32_0 = arith.constant 0 : i32
    %c0_i32_1 = arith.constant 0 : i32
    return %c0_i32, %c0_i32_0 : i32, i32
  }
  func.func @transform_6(%arg0: i32) -> (i32, i32) {
    %c0_i32 = arith.constant 0 : i32
    %c0_i32_0 = arith.constant 0 : i32
    %c0_i32_1 = arith.constant 0 : i32
    return %c0_i32, %c0_i32_0 : i32, i32
  }
  func.func @transform_7(%arg0: i32) -> (i32, i32) {
    %c0_i32 = arith.constant 0 : i32
    %c0_i32_0 = arith.constant 0 : i32
    return %c0_i32, %arg0 : i32, i32
  }
}

</mosaic_0001>

<llo_original>
// kernel: tpu_custom_call.1
$region0: #{tpu_custom_call.1}
  #allocation0 [shape = 'u32[]', space=smem, size = 0x4, offset = 0x4, fixed_abs, tag = 'smem constant byte address 0x4 - core index']
  #allocation1 [shape = 'u32[72,128]{1,0:T(1,128)}', space=vmem, size = 0x9000, scoped, tag = 'internal scratch']
  #allocation2 [shape = 'f32[1,1]{1,0:T(1,128)S(1)}', space=vmem, size = 0x200, scoped, tag = 'scoped memory for tpu_custom_call.1']
  %s0 = inlined_call_operand.vmem [shape: f32[8,16], index: 0, kind: input, shape index: {}]
  %s1 = inlined_call_operand.vmem [shape: f32[16,32], index: 1, kind: input, shape index: {}]
  %s2 = inlined_call_operand.vmem [shape: f32[1,32], index: 2, kind: input, shape index: {}]
  %s3 = inlined_call_operand.vmem [shape: f32[32,16], index: 3, kind: input, shape index: {}]
  %s4 = inlined_call_operand.vmem [shape: f32[1,16], index: 4, kind: input, shape index: {}]
  %s5 = inlined_call_operand.vmem [shape: f32[1,16], index: 5, kind: input, shape index: {}]
  %s6 = inlined_call_operand.<no memory space> [shape: f32[1,1], index: 6, kind: input, shape index: {}]
  %s7 = inlined_call_operand.hbm [shape: f32[1,8], index: 7, kind: output, shape index: {}]
  %s8 = sld [smem:[#allocation0]]
  $region38: #{tpu_custom_call.1} parent=0
    _
  %s10 = ssub.s32 1, %s8
  %s11 = scalar_select 0, %s10, %s8
  %v12 = vstv %s6
  %13 = vst [vmem:[#allocation2] sm:$0x1] %v12
  $region1: #{tpu_custom_call.1} parent=0
    #allocation3 [shape = 'u8[512]{0}', space=vmem, size = 0x400, scoped, tag = 'output window, operand 0, single buffered']
    #allocation4 [shape = 's32[1]{0}', space=sflag, size = 0x4, scoped, tag = 'scoped memory for tpu_custom_call.1']
    %14 = vsyncpa [#allocation4], 0
    // Predicated region
    $region2: #{tpu_custom_call.1} parent=1 // pred_check
      _
    $region3: #{tpu_custom_call.1} parent=1 // pred_check_branch
      %16 = sbr.rel (0) target = $region5
    $region4: #{tpu_custom_call.1} parent=1 // pred_region
      _
    $region5: #{tpu_custom_call.1} parent=1 // pred_fallthru
      _
    // Predicated region
    $region6: #{tpu_custom_call.1} parent=1 // pred_check
      _
    $region7: #{tpu_custom_call.1} parent=1 // pred_check_branch
      %18 = sbr.rel (0) target = $region9
    $region8: #{tpu_custom_call.1} parent=1 // pred_region
      _
    $region9: #{tpu_custom_call.1} parent=1 // pred_fallthru
      _
    // Predicated region
    $region10: #{tpu_custom_call.1} parent=1 // pred_check
      _
    $region11: #{tpu_custom_call.1} parent=1 // pred_check_branch
      %20 = sbr.rel (0) target = $region13
    $region12: #{tpu_custom_call.1} parent=1 // pred_region
      _
    $region13: #{tpu_custom_call.1} parent=1 // pred_fallthru
      _
    // Predicated region
    $region14: #{tpu_custom_call.1} parent=1 // pred_check
      _
    $region15: #{tpu_custom_call.1} parent=1 // pred_check_branch
      %22 = sbr.rel (0) target = $region17
    $region16: #{tpu_custom_call.1} parent=1 // pred_region
      _
    $region17: #{tpu_custom_call.1} parent=1 // pred_fallthru
      _
    // Predicated region
    $region18: #{tpu_custom_call.1} parent=1 // pred_check
      _
    $region19: #{tpu_custom_call.1} parent=1 // pred_check_branch
      %24 = sbr.rel (0) target = $region21
    $region20: #{tpu_custom_call.1} parent=1 // pred_region
      _
    $region21: #{tpu_custom_call.1} parent=1 // pred_fallthru
      _
    // Predicated region
    $region22: #{tpu_custom_call.1} parent=1 // pred_check
      _
    $region23: #{tpu_custom_call.1} parent=1 // pred_check_branch
      %26 = sbr.rel (0) target = $region25
    $region24: #{tpu_custom_call.1} parent=1 // pred_region
      _
    $region25: #{tpu_custom_call.1} parent=1 // pred_fallthru
      _
    // Predicated region
    $region26: #{tpu_custom_call.1} parent=1 // pred_check
      _
    $region27: #{tpu_custom_call.1} parent=1 // pred_check_branch
      %28 = sbr.rel (0) target = $region29
    $region28: #{tpu_custom_call.1} parent=1 // pred_region
      _
    $region29: #{tpu_custom_call.1} parent=1 // pred_fallthru
      _
    %v29 = vld [vmem:[%s0] sm:$0xff]
    %v30 = vld [vmem:[%s1] sm:$0xff]
    %v31 = vld [vmem:[%s1 + $0x8] sm:$0xff]
    %v32 = vld [vmem:[%s2] sm:$0x1]
    %v34 = vperm.slane %v32, 0
    %vm36 = vcmask 130048
    %v38 = vsel %vm36, %v29, 0
    %40 = vmatpush.msra.mxu0 0.0
    %41 = vmatpush.msra.mxu0 0.0
    %42 = vmatpush.msra.mxu0 0.0
    %43 = vmatpush.msra.mxu0 0.0
    %44 = vmatpush.msra.mxu0 0.0
    %45 = vmatpush.msra.mxu0 0.0
    %46 = vmatpush.msra.mxu0 0.0
    %47 = vmatpush.msra.mxu0 0.0
    %48 = vmatpush.msra.mxu0 0.0
    %49 = vmatpush.msra.mxu0 0.0
    %50 = vmatpush.msra.mxu0 0.0
    %51 = vmatpush.msra.mxu0 0.0
    %52 = vmatpush.msra.mxu0 0.0
    %53 = vmatpush.msra.mxu0 0.0
    %54 = vmatpush.msra.mxu0 %v31
    %55 = vmatpush.msra.mxu0 %v30
    %56 = vmatmul.f32.gmra.mxu0 %v38
    %v57 = vpop.f32.mrf.mxu0
    %v58 = vadd.f32 %v34, %v57
    %59 = vdwg.mxu0
    %v60 = vmax.f32 %v58, 0.0
    %v61 = vld [vmem:[%s3] sm:$0xff]
    %v62 = vld [vmem:[%s3 + $0x8] sm:$0xff]
    %v63 = vld [vmem:[%s3 + $0x10] sm:$0xff]
    %v64 = vld [vmem:[%s3 + $0x18] sm:$0xff]
    %v65 = vld [vmem:[%s4] sm:$0x1]
    %v67 = vperm.slane %v65, 0
    %vm69 = vcmask 261120
    %v71 = vsel %vm69, %v60, 0
    %73 = vmatpush.msra.mxu0 0.0
    %74 = vmatpush.msra.mxu0 0.0
    %75 = vmatpush.msra.mxu0 0.0
    %76 = vmatpush.msra.mxu0 0.0
    %77 = vmatpush.msra.mxu0 0.0
    %78 = vmatpush.msra.mxu0 0.0
    %79 = vmatpush.msra.mxu0 0.0
    %80 = vmatpush.msra.mxu0 0.0
    %81 = vmatpush.msra.mxu0 0.0
    %82 = vmatpush.msra.mxu0 0.0
    %83 = vmatpush.msra.mxu0 0.0
    %84 = vmatpush.msra.mxu0 0.0
    %85 = vmatpush.msra.mxu0 %v64
    %86 = vmatpush.msra.mxu0 %v63
    %87 = vmatpush.msra.mxu0 %v62
    %88 = vmatpush.msra.mxu0 %v61
    %89 = vmatmul.f32.gmra.mxu0 %v71
    %v90 = vpop.f32.mrf.mxu0
    %v91 = vadd.f32 %v67, %v90
    %92 = vdwg.mxu0
    %v93 = vmax.f32 %v91, 0.0
    %v94 = vld [vmem:[%s5] sm:$0x1]
    %v96 = vperm.slane %v94, 0
    %v98 = vmul.f32 %v93, %v96
    %v99 = vsel %vm36, %v98, 0.0
    %100 = vadd.xlane.f32.xlu0 %v99
    %v101 = vpop.xlane.xlu0 %100
    %v102 = vld [vmem:[#allocation2] sm:$0x1]
    %104 = vset.pattern.permute.xlu0 0
    %105 = vperm.xlu0 %104, %v102
    %v106 = vpop.permute.xlu0 %105
    %v108 = vperm.slane %v106, 0
    %v109 = vadd.f32 %v101, %v108
    %v111 = vlaneseq
    %v112 = vand.u32 %v111, 127
    %v113 = vperm.slane %v109, %v112
    %vm115 = vcmask 57344
    %116 = vst.msk [vmem:[#allocation3] sm:$0x1] %vm115, %v113
    // Predicated region
    $region30: #{tpu_custom_call.1} parent=1 // pred_check
      _
    $region31: #{tpu_custom_call.1} parent=1 // pred_check_branch
      %118 = sbr.rel (0) target = $region33
    $region32: #{tpu_custom_call.1} parent=1 // pred_region
      %120 = vsyncadd [#allocation4], 0
      %s122 = sshll.u32 [#allocation3], 4
      %s123 = int_to_ptr.vmem [resolvable:$true] %s122
      %s124 = sshll.u32 %s7, 4
      %s125 = int_to_ptr.hbm [resolvable:$true] %s124
      %127 = dma.vmem_to_hbm [thread:$0]  %s123, 16, %s125, [#allocation4]
    $region33: #{tpu_custom_call.1} parent=1 // pred_fallthru
      _
    // Predicated region
    $region34: #{tpu_custom_call.1} parent=1 // pred_check
      _
    $region35: #{tpu_custom_call.1} parent=1 // pred_check_branch
      %129 = sbr.rel (0) target = $region37
    $region36: #{tpu_custom_call.1} parent=1 // pred_region
      %131 = dma.done [#allocation4], 16
    $region37: #{tpu_custom_call.1} parent=1 // pred_fallthru
      _
    %132 = vsyncpa [#allocation4], 1

</llo_original>
